<compile_context>
chip_gen: v5e
topology: v5e:2x2
jax: 0.10.0
libtpu: 0.0.40
codegen_flags: <defaults>
</compile_context>

<pallas_src>
import functools
import math

import jax
import jax.numpy as jnp
from jax.experimental import pallas as pl
from jax.experimental.pallas import tpu as pltpu


def _round_up(x, m):
    return ((x + m - 1) // m) * m


# ----------------------------------------------------------------------------
# Pallas kernel: y = (x + bias) @ W * weight   on a (TM, G) row tile
#   x_ref      : (TM, G)      activation tile
#   w_ref      : (G, R_pad)   stacked, transposed, lane-padded irrep matrices
#   bias_ref   : (1, G)       bias broadcast row
#   weight_ref : (1, R_pad)   weight broadcast row
#   o_ref      : (TM, R_pad)  lane-dense (128-multiple) output tile
# ----------------------------------------------------------------------------
def _featurize_kernel(x_ref, w_ref, bias_ref, weight_ref, o_ref):
    xb = x_ref[...] + bias_ref[...]                                    # VPU
    y = jnp.dot(xb, w_ref[...], preferred_element_type=jnp.float32)    # MXU
    o_ref[...] = y * weight_ref[...]                                   # VPU


def d12_featurize_pallas(Q_mats, bias, weight, x, *, block_m=512):
    """Fused D12_featurize forward.

    Q_mats: dict {k: (rows_k, G)} fixed change-of-basis matrices.
    bias, weight: shape-(1,) parameters (as in the nn.Module).
    x: (..., G) input (D12_vec_perm).
    Returns {k: (..., rows_k, 1)} float32.
    """
    keys = sorted(Q_mats.keys())
    G = x.shape[-1]
    rows = {k: Q_mats[k].shape[0] for k in keys}

    # Stack all irrep matrices into one pre-transposed weight (G, R_total),
    # then pad the output/lane dim up to a multiple of 128 for dense stores.
    W = jnp.concatenate([Q_mats[k].T.astype(jnp.float32) for k in keys], axis=1)
    R_total = W.shape[1]
    R_pad = _round_up(max(R_total, 128), 128)
    W = jnp.pad(W, ((0, 0), (0, R_pad - R_total)))

    lead_shape = x.shape[:-1]
    M = int(math.prod(lead_shape)) if lead_shape else 1
    x2 = x.reshape(M, G).astype(jnp.float32)

    # Row tiling: TM rows per grid step (multiple of 8 sublanes); pad M to TM.
    TM = _round_up(min(block_m, _round_up(M, 8)), 8)
    M_pad = _round_up(M, TM)
    if M_pad != M:
        x2 = jnp.pad(x2, ((0, M_pad - M), (0, 0)))

    bias_row = jnp.full((1, G), bias.reshape(()), dtype=jnp.float32)
    weight_row = jnp.full((1, R_pad), weight.reshape(()), dtype=jnp.float32)

    y = pl.pallas_call(
        _featurize_kernel,
        out_shape=jax.ShapeDtypeStruct((M_pad, R_pad), jnp.float32),
        grid_spec=pltpu.PrefetchScalarGridSpec(
            num_scalar_prefetch=0,
            grid=(M_pad // TM,),
            in_specs=[
                pl.BlockSpec((TM, G), lambda i: (i, 0)),
                pl.BlockSpec((G, R_pad), lambda i: (0, 0)),
                pl.BlockSpec((1, G), lambda i: (0, 0)),
                pl.BlockSpec((1, R_pad), lambda i: (0, 0)),
            ],
            out_specs=pl.BlockSpec((TM, R_pad), lambda i: (i, 0)),
        ),
        compiler_params=pltpu.CompilerParams(
            dimension_semantics=("parallel",),
            vmem_limit_bytes=32 * 1024 * 1024,
        ),
    )(x2, W, bias_row, weight_row)

    # Split the fused output back into the per-irrep dict (cheap slicing glue).
    out = {}
    off = 0
    for k in keys:
        r = rows[k]
        out[k] = y[:M, off:off + r].reshape(*lead_shape, r, 1)
        off += r
    return out


# ----------------------------------------------------------------------------
# Pure-JAX reference mirroring the PyTorch module exactly (for a silent check).
# ----------------------------------------------------------------------------
def _ref_d12_featurize(Q_mats, bias, weight, x):
    xb = (x + bias)[..., None]                        # (..., G, 1)
    return {k: (Q_mats[k] @ xb) * weight for k in Q_mats}


if __name__ == "__main__":
    # D12 (dihedral group of order 24): regular-rep dim G = 24; irreps
    # A1,A2,B1,B2 contribute 1 row each and E1..E5 contribute 4 rows each
    # in the regular-rep decomposition (sum of rows = 24).
    IRREP_ROWS = {"A1": 1, "A2": 1, "B1": 1, "B2": 1,
                  "E1": 4, "E2": 4, "E3": 4, "E4": 4, "E5": 4}
    G = 24
    B, S = 2, 8

    root = jax.random.PRNGKey(0)
    kq, kx = jax.random.split(root, 2)

    # Fixed (non-trainable) D12 change-of-basis matrices: synthetic but deterministic.
    D12_Q = {}
    for name, kk in zip(sorted(IRREP_ROWS), jax.random.split(kq, len(IRREP_ROWS))):
        D12_Q[name] = jax.random.normal(kk, (IRREP_ROWS[name], G), jnp.float32)

    x = jax.random.normal(kx, (B, S, G), jnp.float32)   # D12_vec_perm
    bias = jnp.array([0.25], jnp.float32)                # module init: zeros(1)
    weight = jnp.array([1.5], jnp.float32)               # module init: ones(1)

    # block_m=8 so the toy run exercises a multi-step (grid=(2,)) pipelined grid.
    fwd = jax.jit(functools.partial(d12_featurize_pallas, block_m=8))
    out = fwd(D12_Q, bias, weight, x)
    out = jax.tree_util.tree_map(jax.block_until_ready, out)

    # Silent numerical sanity check against the exact module semantics.
    ref = _ref_d12_featurize(D12_Q, bias, weight, x)
    for k in D12_Q:
        assert out[k].shape == (B, S, IRREP_ROWS[k], 1), k
        assert jnp.allclose(out[k], ref[k], atol=1e-4, rtol=1e-4), k

    print("KERNEL_OK")
</pallas_src>

<mosaic_0001>
module attributes {stable_mosaic.version = 11 : i64} {
  func.func @_featurize_kernel(%arg0: i32, %arg1: memref<8x24xf32, #tpu.memory_space<vmem>>, %arg2: memref<24x128xf32, #tpu.memory_space<vmem>>, %arg3: memref<1x24xf32, #tpu.memory_space<vmem>>, %arg4: memref<1x128xf32, #tpu.memory_space<vmem>>, %arg5: memref<8x128xf32, #tpu.memory_space<vmem>>) attributes {dimension_semantics = [#tpu.dimension_semantics<parallel>], iteration_bounds = array<i64: 2>, scalar_prefetch = 0 : i64, scratch_operands = 0 : i64, tpu.core_type = #tpu.core_type<tc>, window_params = [{transform_indices = @transform_0, window_bounds = array<i64: 8, 24>}, {pipeline_mode = #tpu.pipeline_mode<synchronous>, transform_indices = @transform_1, window_bounds = array<i64: 24, 128>}, {pipeline_mode = #tpu.pipeline_mode<synchronous>, transform_indices = @transform_2, window_bounds = array<i64: 1, 24>}, {pipeline_mode = #tpu.pipeline_mode<synchronous>, transform_indices = @transform_3, window_bounds = array<i64: 1, 128>}, {transform_indices = @transform_4, window_bounds = array<i64: 8, 128>}]} {
    %c0 = arith.constant 0 : index
    %c0_0 = arith.constant 0 : index
    %0 = vector.load %arg1[%c0, %c0_0] : memref<8x24xf32, #tpu.memory_space<vmem>>, vector<8x24xf32>
    %c0_1 = arith.constant 0 : index
    %c0_2 = arith.constant 0 : index
    %1 = vector.load %arg3[%c0_1, %c0_2] : memref<1x24xf32, #tpu.memory_space<vmem>>, vector<1x24xf32>
    %2 = vector.broadcast %1 : vector<1x24xf32> to vector<8x24xf32>
    %3 = arith.addf %0, %2 : vector<8x24xf32>
    %c0_3 = arith.constant 0 : index
    %c0_4 = arith.constant 0 : index
    %4 = vector.load %arg2[%c0_3, %c0_4] : memref<24x128xf32, #tpu.memory_space<vmem>>, vector<24x128xf32>
    %cst = arith.constant dense<0.000000e+00> : vector<8x128xf32>
    %5 = tpu.matmul %3, %4, %cst {dimension_numbers = #tpu.dot_dimension_numbers<[1], [0], [0], [1], [0, 0, 1, 1], [], []>} : vector<8x24xf32>, vector<24x128xf32>, vector<8x128xf32> -> vector<8x128xf32>
    %c0_5 = arith.constant 0 : index
    %c0_6 = arith.constant 0 : index
    %6 = vector.load %arg4[%c0_5, %c0_6] : memref<1x128xf32, #tpu.memory_space<vmem>>, vector<1x128xf32>
    %7 = vector.broadcast %6 : vector<1x128xf32> to vector<8x128xf32>
    %8 = arith.mulf %5, %7 : vector<8x128xf32>
    %c0_7 = arith.constant 0 : index
    %c0_8 = arith.constant 0 : index
    %9 = vector.load %arg5[%c0_7, %c0_8] : memref<8x128xf32, #tpu.memory_space<vmem>>, vector<8x128xf32>
    tpu.vector_store %arg5[%c0_7, %c0_8], %8 {strides = array<i32>} : memref<8x128xf32, #tpu.memory_space<vmem>>, vector<8x128xf32>,
    return
  }
  func.func @transform_0(%arg0: i32) -> (i32, i32) {
    %c0_i32 = arith.constant 0 : i32
    %c0_i32_0 = arith.constant 0 : i32
    return %arg0, %c0_i32 : i32, i32
  }
  func.func @transform_1(%arg0: i32) -> (i32, i32) {
    %c0_i32 = arith.constant 0 : i32
    %c0_i32_0 = arith.constant 0 : i32
    %c0_i32_1 = arith.constant 0 : i32
    return %c0_i32, %c0_i32_0 : i32, i32
  }
  func.func @transform_2(%arg0: i32) -> (i32, i32) {
    %c0_i32 = arith.constant 0 : i32
    %c0_i32_0 = arith.constant 0 : i32
    %c0_i32_1 = arith.constant 0 : i32
    return %c0_i32, %c0_i32_0 : i32, i32
  }
  func.func @transform_3(%arg0: i32) -> (i32, i32) {
    %c0_i32 = arith.constant 0 : i32
    %c0_i32_0 = arith.constant 0 : i32
    %c0_i32_1 = arith.constant 0 : i32
    return %c0_i32, %c0_i32_0 : i32, i32
  }
  func.func @transform_4(%arg0: i32) -> (i32, i32) {
    %c0_i32 = arith.constant 0 : i32
    %c0_i32_0 = arith.constant 0 : i32
    return %arg0, %c0_i32 : i32, i32
  }
}

</mosaic_0001>

<llo_original>
// kernel: d12_featurize_pallas.1
$region0: #{d12_featurize_pallas.1}
  #allocation0 [shape = 'u32[]', space=smem, size = 0x4, offset = 0x4, fixed_abs, tag = 'smem constant byte address 0x4 - core index']
  #allocation1 [shape = 'u32[72,128]{1,0:T(1,128)}', space=vmem, size = 0x9000, scoped, tag = 'internal scratch']
  %s0 = inlined_call_operand.vmem [shape: f32[16,24], index: 0, kind: input, shape index: {}]
  %s1 = inlined_call_operand.vmem [shape: f32[24,128], index: 1, kind: input, shape index: {}]
  %s2 = inlined_call_operand.vmem [shape: f32[1,24], index: 2, kind: input, shape index: {}]
  %s3 = inlined_call_operand.vmem [shape: f32[1,128], index: 3, kind: input, shape index: {}]
  %s4 = inlined_call_operand.vmem [shape: f32[16,128], index: 4, kind: output, shape index: {}]
  %s5 = sld [smem:[#allocation0]]
  $region49: #{d12_featurize_pallas.1} parent=0
    _
  %s7 = ssub.s32 1, %s5
  %s8 = scalar_select 0, %s7, %s5
  loop: start=0, step=1, limit=4
  $region2: #{d12_featurize_pallas.1} parent=0 // loop_pre_header
    _
  $region3: #{d12_featurize_pallas.1} parent=0 // loop_header
    %s10 = sphi 0, %s14
    %p11 = scmp.ge.s32.totalorder %s10, 4
    %s20 = sphi 0, %s22
    %s23 = sphi 0, %s20
    %s24 = sphi 0, %s23
    %s40 = sphi 0, %s24
    %s44 = sphi 0, %s44
    %s46 = sphi 0, %s44
    %s47 = sphi 0, %s46
    %s61 = sphi 0, %s47
    %s65 = sphi 0, %s65
    %s67 = sphi 0, %s65
    %s68 = sphi 0, %s67
    %s82 = sphi 0, %s68
    %s86 = sphi 0, %s86
    %s88 = sphi 0, %s86
    %s89 = sphi 0, %s88
    %s103 = sphi 0, %s89
    %s109 = sphi 0, %s111
    %s112 = sphi 0, %s109
    %s113 = sphi 0, %s112
    %s129 = sphi 0, %s113
  $region4: #{d12_featurize_pallas.1} parent=0 // loop_header_branch
    %13 = sbr.rel (%p11) target = $region8
  $region5: #{d12_featurize_pallas.1} parent=0 // loop_body
    %s15 = ssub.s32 %s10, 1
    %s16 = ssub.s32 %s10, 2
    %s17 = sadd.s32 %s10, 1
    %s18 = ssub.s32 %s10, %s17
    %p19 = scmp.eq.s32.totalorder %s18, 0
    %s21 = sadd.s32 %s20, 1
    %s22 = scalar_select %p19, %s20, %s21
    %p25 = pneg %p19
    %p26 = scmp.eq.s32.totalorder %s10, 1
    %p27 = por %p25, %p26
    %p28 = scmp.ne.s32.totalorder %s20, %s23
    %p29 = scmp.eq.s32.totalorder %s10, 0
    %p30 = por %p28, %p29
    %p31 = scmp.ne.s32.totalorder %s20, %s23
    %p32 = scmp.eq.s32.totalorder %s15, 1
    %p33 = por %p31, %p32
    %p34 = scmp.ne.s32.totalorder %s23, %s24
    %p35 = scmp.eq.s32.totalorder %s15, 0
    %p36 = por %p34, %p35
    %p37 = scmp.ne.s32.totalorder %s23, %s24
    %p38 = scmp.eq.s32.totalorder %s16, 1
    %p39 = por %p37, %p38
    %p41 = scmp.ne.s32.totalorder %s24, %s40
    %p42 = scmp.eq.s32.totalorder %s16, 0
    %p43 = por %p41, %p42
    %s45 = sadd.s32 %s44, 1
    %p48 = scmp.eq.s32.totalorder %s10, 1
    %p49 = scmp.ne.s32.totalorder %s44, %s46
    %p50 = scmp.eq.s32.totalorder %s10, 0
    %p51 = por %p49, %p50
    %p52 = scmp.ne.s32.totalorder %s44, %s46
    %p53 = scmp.eq.s32.totalorder %s15, 1
    %p54 = por %p52, %p53
    %p55 = scmp.ne.s32.totalorder %s46, %s47
    %p56 = scmp.eq.s32.totalorder %s15, 0
    %p57 = por %p55, %p56
    %p58 = scmp.ne.s32.totalorder %s46, %s47
    %p59 = scmp.eq.s32.totalorder %s16, 1
    %p60 = por %p58, %p59
    %p62 = scmp.ne.s32.totalorder %s47, %s61
    %p63 = scmp.eq.s32.totalorder %s16, 0
    %p64 = por %p62, %p63
    %s66 = sadd.s32 %s65, 1
    %p69 = scmp.eq.s32.totalorder %s10, 1
    %p70 = scmp.ne.s32.totalorder %s65, %s67
    %p71 = scmp.eq.s32.totalorder %s10, 0
    %p72 = por %p70, %p71
    %p73 = scmp.ne.s32.totalorder %s65, %s67
    %p74 = scmp.eq.s32.totalorder %s15, 1
    %p75 = por %p73, %p74
    %p76 = scmp.ne.s32.totalorder %s67, %s68
    %p77 = scmp.eq.s32.totalorder %s15, 0
    %p78 = por %p76, %p77
    %p79 = scmp.ne.s32.totalorder %s67, %s68
    %p80 = scmp.eq.s32.totalorder %s16, 1
    %p81 = por %p79, %p80
    %p83 = scmp.ne.s32.totalorder %s68, %s82
    %p84 = scmp.eq.s32.totalorder %s16, 0
    %p85 = por %p83, %p84
    %s87 = sadd.s32 %s86, 1
    %p90 = scmp.eq.s32.totalorder %s10, 1
    %p91 = scmp.ne.s32.totalorder %s86, %s88
    %p92 = scmp.eq.s32.totalorder %s10, 0
    %p93 = por %p91, %p92
    %p94 = scmp.ne.s32.totalorder %s86, %s88
    %p95 = scmp.eq.s32.totalorder %s15, 1
    %p96 = por %p94, %p95
    %p97 = scmp.ne.s32.totalorder %s88, %s89
    %p98 = scmp.eq.s32.totalorder %s15, 0
    %p99 = por %p97, %p98
    %p100 = scmp.ne.s32.totalorder %s88, %s89
    %p101 = scmp.eq.s32.totalorder %s16, 1
    %p102 = por %p100, %p101
    %p104 = scmp.ne.s32.totalorder %s89, %s103
    %p105 = scmp.eq.s32.totalorder %s16, 0
    %p106 = por %p104, %p105
    %s107 = ssub.s32 %s10, %s17
    %p108 = scmp.eq.s32.totalorder %s107, 0
    %s110 = sadd.s32 %s109, 1
    %s111 = scalar_select %p108, %s109, %s110
    %p114 = pneg %p108
    %p115 = scmp.eq.s32.totalorder %s10, 1
    %p116 = por %p114, %p115
    %p117 = scmp.ne.s32.totalorder %s109, %s112
    %p118 = scmp.eq.s32.totalorder %s10, 0
    %p119 = por %p117, %p118
    %p120 = scmp.ne.s32.totalorder %s109, %s112
    %p121 = scmp.eq.s32.totalorder %s15, 1
    %p122 = por %p120, %p121
    %p123 = scmp.ne.s32.totalorder %s112, %s113
    %p124 = scmp.eq.s32.totalorder %s15, 0
    %p125 = por %p123, %p124
    %p126 = scmp.ne.s32.totalorder %s112, %s113
    %p127 = scmp.eq.s32.totalorder %s16, 1
    %p128 = por %p126, %p127
    %p130 = scmp.ne.s32.totalorder %s113, %s129
    %p131 = scmp.eq.s32.totalorder %s16, 0
    %p132 = por %p130, %p131
    %p133 = scmp.le.s32.totalorder 1, %s10
    %p134 = scmp.lt.s32.totalorder %s10, 3
    %p135 = pnand %p133, %p134
    %p136 = pneg %p135
    // Predicated region
    $region9: #{d12_featurize_pallas.1} parent=5 // pred_check
      _
    $region10: #{d12_featurize_pallas.1} parent=5 // pred_check_branch
      %138 = sbr.rel (%p135) target = $region12
    $region11: #{d12_featurize_pallas.1} parent=5 // pred_region
      %s139 = ssub.s32 %s10, 1
      // Predicated region
      $region13: #{d12_featurize_pallas.1} parent=11 // pred_check
        %p140 = pneg %p57
      $region14: #{d12_featurize_pallas.1} parent=11 // pred_check_branch
        %142 = sbr.rel (%p140) target = $region16
      $region15: #{d12_featurize_pallas.1} parent=11 // pred_region
        _
      $region16: #{d12_featurize_pallas.1} parent=11 // pred_fallthru
        _
      // Predicated region
      $region17: #{d12_featurize_pallas.1} parent=11 // pred_check
        %p143 = pneg %p78
      $region18: #{d12_featurize_pallas.1} parent=11 // pred_check_branch
        %145 = sbr.rel (%p143) target = $region20
      $region19: #{d12_featurize_pallas.1} parent=11 // pred_region
        _
      $region20: #{d12_featurize_pallas.1} parent=11 // pred_fallthru
        _
      // Predicated region
      $region21: #{d12_featurize_pallas.1} parent=11 // pred_check
        %p146 = pneg %p99
      $region22: #{d12_featurize_pallas.1} parent=11 // pred_check_branch
        %148 = sbr.rel (%p146) target = $region24
      $region23: #{d12_featurize_pallas.1} parent=11 // pred_region
        _
      $region24: #{d12_featurize_pallas.1} parent=11 // pred_fallthru
        _
    $region12: #{d12_featurize_pallas.1} parent=5 // pred_fallthru
      _
    %p149 = scmp.lt.s32.totalorder %s10, 2
    // Predicated region
    $region25: #{d12_featurize_pallas.1} parent=5 // pred_check
      %p150 = pneg %p149
    $region26: #{d12_featurize_pallas.1} parent=5 // pred_check_branch
      %152 = sbr.rel (%p150) target = $region28
    $region27: #{d12_featurize_pallas.1} parent=5 // pred_region
      // Predicated region
      $region29: #{d12_featurize_pallas.1} parent=27 // pred_check
        %p153 = pneg %p30
      $region30: #{d12_featurize_pallas.1} parent=27 // pred_check_branch
        %155 = sbr.rel (%p153) target = $region32
      $region31: #{d12_featurize_pallas.1} parent=27 // pred_region
        %p156 = scmp.lt.s32.totalorder %s10, 1
        %s157 = scalar_select %p156, %s10, 1
        %s158 = smul.addr %s157, 8
        %s159 = scalar_lea.vmem %s0, %s158
      $region32: #{d12_featurize_pallas.1} parent=27 // pred_fallthru
        _
    $region28: #{d12_featurize_pallas.1} parent=5 // pred_fallthru
      _
    %p160 = scmp.le.s32.totalorder 1, %s10
    %p161 = scmp.lt.s32.totalorder %s10, 3
    %p162 = pnand %p160, %p161
    %p163 = pneg %p162
    // Predicated region
    $region33: #{d12_featurize_pallas.1} parent=5 // pred_check
      _
    $region34: #{d12_featurize_pallas.1} parent=5 // pred_check_branch
      %165 = sbr.rel (%p162) target = $region36
    $region35: #{d12_featurize_pallas.1} parent=5 // pred_region
      %s166 = ssub.s32 %s10, 1
      %p167 = scmp.lt.s32.totalorder %s15, 1
      %s168 = scalar_select %p167, %s15, 1
      %s169 = smul.addr %s168, 8
      %s170 = scalar_lea.vmem %s0, %s169
      %p171 = pneg %p36
      %p172 = pneg %p33
      %p173 = pneg %p57
      %p174 = pneg %p54
      %p175 = pneg %p78
      %p176 = pneg %p75
      %p177 = pneg %p99
      %p178 = pneg %p96
      %p179 = pneg %p125
      %p180 = pneg %p122
      %p181 = scmp.lt.s32.totalorder %s15, 1
      %s182 = scalar_select %p181, %s15, 1
      %s183 = smul.addr %s182, 8
      %s184 = scalar_lea.vmem %s4, %s183
      %p185 = scmp.lt.s32.totalorder %s15, 1
      %s186 = scalar_select %p185, %s15, 1
      %s187 = smul.addr %s186, 8
      %s188 = scalar_lea.vmem %s0, %s187
      %p189 = scmp.lt.s32.totalorder %s15, 1
      %s190 = scalar_select %p189, %s15, 1
      %s191 = smul.addr %s190, 8
      %s192 = scalar_lea.vmem %s4, %s191
      %v193 = vld [vmem:[%s188] sm:$0xff]
      %v194 = vld [vmem:[%s2] sm:$0x1]
      %v196 = vperm.slane %v194, 0
      %v198 = vadd.f32 %v193, %v196
      %v199 = vld [vmem:[%s1] sm:$0xff]
      %v200 = vld [vmem:[%s1 + $0x8] sm:$0xff]
      %v201 = vld [vmem:[%s1 + $0x10] sm:$0xff]
      %vm202 = vcmask 195584
      %v204 = vsel %vm202, %v198, 0
      %206 = vmatpush.msra.mxu0 0.0
      %207 = vmatpush.msra.mxu0 0.0
      %208 = vmatpush.msra.mxu0 0.0
      %209 = vmatpush.msra.mxu0 0.0
      %210 = vmatpush.msra.mxu0 0.0
      %211 = vmatpush.msra.mxu0 0.0
      %212 = vmatpush.msra.mxu0 0.0
      %213 = vmatpush.msra.mxu0 0.0
      %214 = vmatpush.msra.mxu0 0.0
      %215 = vmatpush.msra.mxu0 0.0
      %216 = vmatpush.msra.mxu0 0.0
      %217 = vmatpush.msra.mxu0 0.0
      %218 = vmatpush.msra.mxu0 0.0
      %219 = vmatpush.msra.mxu0 %v201
      %220 = vmatpush.msra.mxu0 %v200
      %221 = vmatpush.msra.mxu0 %v199
      %222 = vmatmul.f32.gmra.mxu0 %v204
      %v223 = vpop.f32.mrf.mxu0
      %v224 = vadd.f32 0.0, %v223
      %225 = vdwg.mxu0
      %v226 = vld [vmem:[%s3] sm:$0x1]
      %v228 = vperm.slane %v226, 0
      %v230 = vmul.f32 %v224, %v228
      %231 = vst [vmem:[%s192] sm:$0xff] %v230
      %p232 = scmp.lt.s32.totalorder %s15, 1
      %s233 = scalar_select %p232, %s15, 1
      %s234 = smul.addr %s233, 8
      %s235 = scalar_lea.vmem %s4, %s234
      // Predicated region
      $region37: #{d12_featurize_pallas.1} parent=35 // pred_check
        %p236 = pneg %p122
      $region38: #{d12_featurize_pallas.1} parent=35 // pred_check_branch
        %238 = sbr.rel (%p236) target = $region40
      $region39: #{d12_featurize_pallas.1} parent=35 // pred_region
        _
      $region40: #{d12_featurize_pallas.1} parent=35 // pred_fallthru
        _
    $region36: #{d12_featurize_pallas.1} parent=5 // pred_fallthru
      _
    %p239 = scmp.le.s32.totalorder 2, %s10
    // Predicated region
    $region41: #{d12_featurize_pallas.1} parent=5 // pred_check
      %p240 = pneg %p239
    $region42: #{d12_featurize_pallas.1} parent=5 // pred_check_branch
      %242 = sbr.rel (%p240) target = $region44
    $region43: #{d12_featurize_pallas.1} parent=5 // pred_region
      %s243 = ssub.s32 %s10, 2
      // Predicated region
      $region45: #{d12_featurize_pallas.1} parent=43 // pred_check
        %p244 = pneg %p128
      $region46: #{d12_featurize_pallas.1} parent=43 // pred_check_branch
        %246 = sbr.rel (%p244) target = $region48
      $region47: #{d12_featurize_pallas.1} parent=43 // pred_region
        %p247 = scmp.lt.s32.totalorder %s16, 1
        %s248 = scalar_select %p247, %s16, 1
        %s249 = smul.addr %s248, 8
        %s250 = scalar_lea.vmem %s4, %s249
      $region48: #{d12_featurize_pallas.1} parent=43 // pred_fallthru
        _
    $region44: #{d12_featurize_pallas.1} parent=5 // pred_fallthru
      _
  $region6: #{d12_featurize_pallas.1} parent=0 // loop_footer
    %s14 = sadd.s32 1, %s10
  $region7: #{d12_featurize_pallas.1} parent=0 // loop_footer_branch
    %9 = sbr.rel target = $region3
  $region8: #{d12_featurize_pallas.1} parent=0 // loop_exit
    _

</llo_original>
